<compile_context>
chip_gen: v5e
topology: v5e:2x2
jax: 0.10.0
libtpu: 0.0.40
codegen_flags: <defaults>
</compile_context>

<pallas_src>
import jax
import jax.numpy as jnp
from jax.experimental import pallas as pl
from jax.experimental.pallas import tpu as pltpu

HIDDEN = 128
LANE = 128
SUBLANE = 8
MAX_TB = 2048       # batch-tile cap (review: 2048-4096; 2048 keeps v5e's 16 MiB scoped VMEM safe)


def dqn_mlp_kernel(x_ref, w1_ref, b1_ref, w2_ref, b2_ref, w3_ref, b3_ref, o_ref):
    # x: (TB, S) f32 | w1/b1 f32 | w2/w3 bf16, b2/b3 f32 | o: (TB, action_dim) f32
    x = x_ref[...]

    # Layer 1: Linear(state_dim, 128) + ReLU  -- full f32 (raw states keep precision)
    h1 = jnp.dot(x, w1_ref[...], preferred_element_type=jnp.float32) + b1_ref[...]
    h1 = jnp.maximum(h1, 0.0)

    # Layer 2: Linear(128, 128) + ReLU  -- bf16 MXU inputs, f32 accumulate
    h2 = jnp.dot(h1.astype(jnp.bfloat16), w2_ref[...],
                 preferred_element_type=jnp.float32) + b2_ref[...]
    h2 = jnp.maximum(h2, 0.0)

    # Layer 3: Linear(128, action_dim_padded_to_128)  -- Q-values, no activation
    q = jnp.dot(h2.astype(jnp.bfloat16), w3_ref[...],
                preferred_element_type=jnp.float32) + b3_ref[...]

    # Narrow store: only the real action_dim columns go back to HBM.
    o_ref[...] = q[:, :o_ref.shape[1]]


def _round_up(n, m):
    return -(-n // m) * m


def _choose_tiling(batch):
    """Pick (batch_tile, padded_batch)."""
    # Tiny batches (the act() path): one full-array block, no padding, no masked rows.
    if batch <= 2 * SUBLANE:
        return batch, batch
    # Otherwise aim for >= 2 blocks (so the "parallel" axis has work for both v7x
    # TensorCores) while capping the tile at MAX_TB rows to bound the ~0.35 us
    # per-grid-step overhead without blowing VMEM.
    tb = min(MAX_TB, _round_up(pl.cdiv(batch, 2), SUBLANE))
    b_pad = _round_up(batch, tb)
    return tb, b_pad


def prepare_params(params):
    """One-time layout prep: w1/b1 stay f32 (layer-1 precision), w2/w3 -> bf16,
    b2/b3 -> f32, w3/b3 zero-padded to a multiple of 128 output columns so every
    MXU shape is lane-aligned.  Call once; reuse the result for every forward."""
    w1, b1, w2, b2, w3, b3 = params
    action_dim = w3.shape[1]
    n_pad = _round_up(action_dim, LANE)
    w3p = jnp.pad(w3, ((0, 0), (0, n_pad - action_dim))).astype(jnp.bfloat16)
    b3p = jnp.pad(b3, ((0, 0), (0, n_pad - action_dim))).astype(jnp.float32)
    return (w1.astype(jnp.float32), b1.astype(jnp.float32),
            w2.astype(jnp.bfloat16), b2.astype(jnp.float32),
            w3p, b3p, action_dim)


def dqn_forward(x, prepped):
    """x: (batch, state_dim) float32 -> (batch, action_dim) float32 Q-values."""
    w1, b1, w2, b2, w3, b3, action_dim = prepped
    batch, state_dim = x.shape

    tb, b_pad = _choose_tiling(batch)
    if b_pad != batch:
        # Only hit when the batch doesn't split evenly; pick training batch sizes
        # that divide by the tile (powers of two) to avoid this extra pass over x.
        x = jnp.pad(x, ((0, b_pad - batch), (0, 0)))
    n_blocks = b_pad // tb

    resident = lambda a: pl.BlockSpec(a.shape, lambda i: (0,) * a.ndim)

    q = pl.pallas_call(
        dqn_mlp_kernel,
        out_shape=jax.ShapeDtypeStruct((b_pad, action_dim), jnp.float32),
        grid=(n_blocks,),
        in_specs=[
            pl.BlockSpec((tb, state_dim), lambda i: (i, 0)),   # x: tiled over batch
            resident(w1), resident(b1),
            resident(w2), resident(b2),
            resident(w3), resident(b3),
        ],
        out_specs=pl.BlockSpec((tb, action_dim), lambda i: (i, 0)),
        compiler_params=pltpu.CompilerParams(
            dimension_semantics=("parallel",),
        ),
    )(x, w1, b1, w2, b2, w3, b3)

    return q if b_pad == batch else q[:batch]


def init_params(key, state_dim, action_dim, hidden=HIDDEN):
    """Deterministic init mirroring PyTorch nn.Linear (uniform +/-1/sqrt(fan_in)).
    Weights stored as (in_features, out_features)."""
    def linear(k, fan_in, fan_out):
        kw, kb = jax.random.split(k)
        bound = 1.0 / jnp.sqrt(fan_in)
        w = jax.random.uniform(kw, (fan_in, fan_out), jnp.float32, -bound, bound)
        b = jax.random.uniform(kb, (1, fan_out), jnp.float32, -bound, bound)
        return w, b

    k1, k2, k3 = jax.random.split(key, 3)
    w1, b1 = linear(k1, state_dim, hidden)
    w2, b2 = linear(k2, hidden, hidden)
    w3, b3 = linear(k3, hidden, action_dim)
    return (w1, b1, w2, b2, w3, b3)


def dqn_reference(x, params):
    w1, b1, w2, b2, w3, b3 = params
    h1 = jnp.maximum(x @ w1 + b1, 0.0)
    h2 = jnp.maximum(h1 @ w2 + b2, 0.0)
    return h2 @ w3 + b3


if __name__ == "__main__":
    state_dim = 32
    action_dim = 8
    batch = 2

    key = jax.random.PRNGKey(0)
    kx, kp = jax.random.split(key)
    x = jax.random.normal(kx, (batch, state_dim), jnp.float32)
    params = init_params(kp, state_dim, action_dim)
    prepped = prepare_params(params)          # one-time cast/pad of weights

    q = dqn_forward(x, prepped)
    q = jax.block_until_ready(q)

    # Reference in f32; kernel uses f32 for layer 1 and bf16 MXU inputs (f32
    # accumulation) for layers 2/3, so tolerance is loosened accordingly.
    q_ref = dqn_reference(x, params)
    assert q.shape == (batch, action_dim)
    assert jnp.allclose(q, q_ref, atol=5e-2, rtol=5e-2), "mismatch vs JAX reference"

    print("KERNEL_OK")
</pallas_src>

<mosaic_0001>
module attributes {stable_mosaic.version = 11 : i64} {
  func.func @dqn_mlp_kernel(%arg0: i32, %arg1: memref<2x32xf32, #tpu.memory_space<vmem>>, %arg2: memref<32x128xf32, #tpu.memory_space<vmem>>, %arg3: memref<1x128xf32, #tpu.memory_space<vmem>>, %arg4: memref<128x128xbf16, #tpu.memory_space<vmem>>, %arg5: memref<1x128xf32, #tpu.memory_space<vmem>>, %arg6: memref<128x128xbf16, #tpu.memory_space<vmem>>, %arg7: memref<1x128xf32, #tpu.memory_space<vmem>>, %arg8: memref<2x8xf32, #tpu.memory_space<vmem>>) attributes {dimension_semantics = [#tpu.dimension_semantics<parallel>], iteration_bounds = array<i64: 1>, scalar_prefetch = 0 : i64, scratch_operands = 0 : i64, tpu.core_type = #tpu.core_type<tc>, window_params = [{transform_indices = @transform_0, window_bounds = array<i64: 2, 32>}, {pipeline_mode = #tpu.pipeline_mode<synchronous>, transform_indices = @transform_1, window_bounds = array<i64: 32, 128>}, {pipeline_mode = #tpu.pipeline_mode<synchronous>, transform_indices = @transform_2, window_bounds = array<i64: 1, 128>}, {pipeline_mode = #tpu.pipeline_mode<synchronous>, transform_indices = @transform_3, window_bounds = array<i64: 128, 128>}, {pipeline_mode = #tpu.pipeline_mode<synchronous>, transform_indices = @transform_4, window_bounds = array<i64: 1, 128>}, {pipeline_mode = #tpu.pipeline_mode<synchronous>, transform_indices = @transform_5, window_bounds = array<i64: 128, 128>}, {pipeline_mode = #tpu.pipeline_mode<synchronous>, transform_indices = @transform_6, window_bounds = array<i64: 1, 128>}, {transform_indices = @transform_7, window_bounds = array<i64: 2, 8>}]} {
    %c0 = arith.constant 0 : index
    %c0_0 = arith.constant 0 : index
    %0 = vector.load %arg1[%c0, %c0_0] : memref<2x32xf32, #tpu.memory_space<vmem>>, vector<2x32xf32>
    %c0_1 = arith.constant 0 : index
    %c0_2 = arith.constant 0 : index
    %1 = vector.load %arg2[%c0_1, %c0_2] : memref<32x128xf32, #tpu.memory_space<vmem>>, vector<32x128xf32>
    %cst = arith.constant dense<0.000000e+00> : vector<2x128xf32>
    %2 = tpu.matmul %0, %1, %cst {dimension_numbers = #tpu.dot_dimension_numbers<[1], [0], [0], [1], [0, 0, 1, 1], [], []>} : vector<2x32xf32>, vector<32x128xf32>, vector<2x128xf32> -> vector<2x128xf32>
    %c0_3 = arith.constant 0 : index
    %c0_4 = arith.constant 0 : index
    %3 = vector.load %arg3[%c0_3, %c0_4] : memref<1x128xf32, #tpu.memory_space<vmem>>, vector<1x128xf32>
    %4 = vector.broadcast %3 : vector<1x128xf32> to vector<2x128xf32>
    %5 = arith.addf %2, %4 : vector<2x128xf32>
    %cst_5 = arith.constant 0.000000e+00 : f32
    %6 = vector.broadcast %cst_5 : f32 to vector<2x128xf32>
    %7 = arith.maximumf %5, %6 : vector<2x128xf32>
    %8 = arith.truncf %7 : vector<2x128xf32> to vector<2x128xbf16>
    %c0_6 = arith.constant 0 : index
    %c0_7 = arith.constant 0 : index
    %9 = vector.load %arg4[%c0_6, %c0_7] : memref<128x128xbf16, #tpu.memory_space<vmem>>, vector<128x128xbf16>
    %cst_8 = arith.constant dense<0.000000e+00> : vector<2x128xf32>
    %10 = tpu.matmul %8, %9, %cst_8 {dimension_numbers = #tpu.dot_dimension_numbers<[1], [0], [0], [1], [0, 0, 1, 1], [], []>} : vector<2x128xbf16>, vector<128x128xbf16>, vector<2x128xf32> -> vector<2x128xf32>
    %c0_9 = arith.constant 0 : index
    %c0_10 = arith.constant 0 : index
    %11 = vector.load %arg5[%c0_9, %c0_10] : memref<1x128xf32, #tpu.memory_space<vmem>>, vector<1x128xf32>
    %12 = vector.broadcast %11 : vector<1x128xf32> to vector<2x128xf32>
    %13 = arith.addf %10, %12 : vector<2x128xf32>
    %cst_11 = arith.constant 0.000000e+00 : f32
    %14 = vector.broadcast %cst_11 : f32 to vector<2x128xf32>
    %15 = arith.maximumf %13, %14 : vector<2x128xf32>
    %16 = arith.truncf %15 : vector<2x128xf32> to vector<2x128xbf16>
    %c0_12 = arith.constant 0 : index
    %c0_13 = arith.constant 0 : index
    %17 = vector.load %arg6[%c0_12, %c0_13] : memref<128x128xbf16, #tpu.memory_space<vmem>>, vector<128x128xbf16>
    %cst_14 = arith.constant dense<0.000000e+00> : vector<2x128xf32>
    %18 = tpu.matmul %16, %17, %cst_14 {dimension_numbers = #tpu.dot_dimension_numbers<[1], [0], [0], [1], [0, 0, 1, 1], [], []>} : vector<2x128xbf16>, vector<128x128xbf16>, vector<2x128xf32> -> vector<2x128xf32>
    %c0_15 = arith.constant 0 : index
    %c0_16 = arith.constant 0 : index
    %19 = vector.load %arg7[%c0_15, %c0_16] : memref<1x128xf32, #tpu.memory_space<vmem>>, vector<1x128xf32>
    %20 = vector.broadcast %19 : vector<1x128xf32> to vector<2x128xf32>
    %21 = arith.addf %18, %20 : vector<2x128xf32>
    %22 = vector.extract_strided_slice %21 {offsets = [0, 0], sizes = [2, 8], strides = [1, 1]} : vector<2x128xf32> to vector<2x8xf32>
    %c0_17 = arith.constant 0 : index
    %c0_18 = arith.constant 0 : index
    %23 = vector.load %arg8[%c0_17, %c0_18] : memref<2x8xf32, #tpu.memory_space<vmem>>, vector<2x8xf32>
    tpu.vector_store %arg8[%c0_17, %c0_18], %22 {strides = array<i32>} : memref<2x8xf32, #tpu.memory_space<vmem>>, vector<2x8xf32>,
    return
  }
  func.func @transform_0(%arg0: i32) -> (i32, i32) {
    %c0_i32 = arith.constant 0 : i32
    %c0_i32_0 = arith.constant 0 : i32
    return %arg0, %c0_i32 : i32, i32
  }
  func.func @transform_1(%arg0: i32) -> (i32, i32) {
    %c0_i32 = arith.constant 0 : i32
    %c0_i32_0 = arith.constant 0 : i32
    %c0_i32_1 = arith.constant 0 : i32
    return %c0_i32, %c0_i32_0 : i32, i32
  }
  func.func @transform_2(%arg0: i32) -> (i32, i32) {
    %c0_i32 = arith.constant 0 : i32
    %c0_i32_0 = arith.constant 0 : i32
    %c0_i32_1 = arith.constant 0 : i32
    return %c0_i32, %c0_i32_0 : i32, i32
  }
  func.func @transform_3(%arg0: i32) -> (i32, i32) {
    %c0_i32 = arith.constant 0 : i32
    %c0_i32_0 = arith.constant 0 : i32
    %c0_i32_1 = arith.constant 0 : i32
    return %c0_i32, %c0_i32_0 : i32, i32
  }
  func.func @transform_4(%arg0: i32) -> (i32, i32) {
    %c0_i32 = arith.constant 0 : i32
    %c0_i32_0 = arith.constant 0 : i32
    %c0_i32_1 = arith.constant 0 : i32
    return %c0_i32, %c0_i32_0 : i32, i32
  }
  func.func @transform_5(%arg0: i32) -> (i32, i32) {
    %c0_i32 = arith.constant 0 : i32
    %c0_i32_0 = arith.constant 0 : i32
    %c0_i32_1 = arith.constant 0 : i32
    return %c0_i32, %c0_i32_0 : i32, i32
  }
  func.func @transform_6(%arg0: i32) -> (i32, i32) {
    %c0_i32 = arith.constant 0 : i32
    %c0_i32_0 = arith.constant 0 : i32
    %c0_i32_1 = arith.constant 0 : i32
    return %c0_i32, %c0_i32_0 : i32, i32
  }
  func.func @transform_7(%arg0: i32) -> (i32, i32) {
    %c0_i32 = arith.constant 0 : i32
    %c0_i32_0 = arith.constant 0 : i32
    return %arg0, %c0_i32 : i32, i32
  }
}

</mosaic_0001>

<llo_original>
// kernel: tpu_custom_call.1
$region0: #{tpu_custom_call.1}
  #allocation0 [shape = 'u32[]', space=smem, size = 0x4, offset = 0x4, fixed_abs, tag = 'smem constant byte address 0x4 - core index']
  #allocation1 [shape = 'u32[72,128]{1,0:T(1,128)}', space=vmem, size = 0x9000, scoped, tag = 'internal scratch']
  %s0 = inlined_call_operand.hbm [shape: f32[2,32], index: 0, kind: input, shape index: {}]
  %s1 = inlined_call_operand.hbm [shape: f32[32,128], index: 1, kind: input, shape index: {}]
  %s2 = inlined_call_operand.vmem [shape: f32[1,128], index: 2, kind: input, shape index: {}]
  %s3 = inlined_call_operand.hbm [shape: bf16[128,128], index: 3, kind: input, shape index: {}]
  %s4 = inlined_call_operand.vmem [shape: f32[1,128], index: 4, kind: input, shape index: {}]
  %s5 = inlined_call_operand.hbm [shape: bf16[128,128], index: 5, kind: input, shape index: {}]
  %s6 = inlined_call_operand.vmem [shape: f32[1,128], index: 6, kind: input, shape index: {}]
  %s7 = inlined_call_operand.hbm [shape: f32[2,8], index: 7, kind: output, shape index: {}]
  %s8 = sld [smem:[#allocation0]]
  $region54: #{tpu_custom_call.1} parent=0
    _
  %s10 = ssub.s32 1, %s8
  %s11 = scalar_select 0, %s10, %s8
  $region1: #{tpu_custom_call.1} parent=0
    #allocation2 [shape = 'u8[1024]{0}', space=vmem, size = 0x400, scoped, tag = 'input window, operand 0, single buffered']
    #allocation3 [shape = 's32[1]{0}', space=sflag, size = 0x4, scoped, tag = 'scoped memory for tpu_custom_call.1']
    #allocation4 [shape = 's32[1]{0}', space=sflag, size = 0x4, scoped, tag = 'scoped memory for tpu_custom_call.1']
    #allocation5 [shape = 'u8[16384]{0}', space=vmem, size = 0x4000, scoped, tag = 'input window, operand 1, single buffered']
    #allocation6 [shape = 's32[1]{0}', space=sflag, size = 0x4, scoped, tag = 'scoped memory for tpu_custom_call.1']
    #allocation7 [shape = 'u8[32768]{0}', space=vmem, size = 0x8000, scoped, tag = 'input window, operand 3, single buffered']
    #allocation8 [shape = 'u8[32768]{0}', space=vmem, size = 0x8000, scoped, tag = 'input window, operand 5, single buffered']
    #allocation9 [shape = 's32[1]{0}', space=sflag, size = 0x4, scoped, tag = 'scoped memory for tpu_custom_call.1']
    #allocation10 [shape = 'u8[1024]{0}', space=vmem, size = 0x400, scoped, tag = 'output window, operand 0, single buffered']
    %12 = vsyncpa [#allocation3], 0
    %13 = vsyncpa [#allocation6], 0
    %14 = vsyncpa [#allocation9], 0
    %15 = vsyncpa [#allocation4], 0
    // Predicated region
    $region2: #{tpu_custom_call.1} parent=1 // pred_check
      _
    $region3: #{tpu_custom_call.1} parent=1 // pred_check_branch
      %17 = sbr.rel (0) target = $region5
    $region4: #{tpu_custom_call.1} parent=1 // pred_region
      %19 = vsyncadd [#allocation3], 0
      %s21 = sshll.u32 %s0, 4
      %s22 = int_to_ptr.hbm [resolvable:$true] %s21
      %s23 = sshll.u32 [#allocation2], 4
      %s24 = int_to_ptr.vmem [resolvable:$true] %s23
      %26 = dma.hbm_to_vmem [thread:$0]  %s22, 32, %s24, [#allocation3]
    $region5: #{tpu_custom_call.1} parent=1 // pred_fallthru
      _
    // Predicated region
    $region6: #{tpu_custom_call.1} parent=1 // pred_check
      _
    $region7: #{tpu_custom_call.1} parent=1 // pred_check_branch
      %28 = sbr.rel (0) target = $region9
    $region8: #{tpu_custom_call.1} parent=1 // pred_region
      %30 = vsyncadd [#allocation6], 0
      %s31 = sshll.u32 %s1, 4
      %s32 = int_to_ptr.hbm [resolvable:$true] %s31
      %s33 = sshll.u32 [#allocation5], 4
      %s34 = int_to_ptr.vmem [resolvable:$true] %s33
      %39 = dma.hbm_to_vmem [thread:$0]  %s32, 512, %s34, [#allocation6], 128, 128, 8
    $region9: #{tpu_custom_call.1} parent=1 // pred_fallthru
      _
    // Predicated region
    $region10: #{tpu_custom_call.1} parent=1 // pred_check
      _
    $region11: #{tpu_custom_call.1} parent=1 // pred_check_branch
      %41 = sbr.rel (0) target = $region13
    $region12: #{tpu_custom_call.1} parent=1 // pred_region
      _
    $region13: #{tpu_custom_call.1} parent=1 // pred_fallthru
      _
    // Predicated region
    $region14: #{tpu_custom_call.1} parent=1 // pred_check
      _
    $region15: #{tpu_custom_call.1} parent=1 // pred_check_branch
      %43 = sbr.rel (0) target = $region17
    $region16: #{tpu_custom_call.1} parent=1 // pred_region
      %45 = vsyncadd [#allocation6], 0
      %s46 = sshll.u32 %s3, 4
      %s47 = int_to_ptr.hbm [resolvable:$true] %s46
      %s48 = sshll.u32 [#allocation7], 4
      %s49 = int_to_ptr.vmem [resolvable:$true] %s48
      %54 = dma.hbm_to_vmem [thread:$0]  %s47, 1024, %s49, [#allocation6], 64, 64, 4
    $region17: #{tpu_custom_call.1} parent=1 // pred_fallthru
      _
    // Predicated region
    $region18: #{tpu_custom_call.1} parent=1 // pred_check
      _
    $region19: #{tpu_custom_call.1} parent=1 // pred_check_branch
      %56 = sbr.rel (0) target = $region21
    $region20: #{tpu_custom_call.1} parent=1 // pred_region
      _
    $region21: #{tpu_custom_call.1} parent=1 // pred_fallthru
      _
    // Predicated region
    $region22: #{tpu_custom_call.1} parent=1 // pred_check
      _
    $region23: #{tpu_custom_call.1} parent=1 // pred_check_branch
      %58 = sbr.rel (0) target = $region25
    $region24: #{tpu_custom_call.1} parent=1 // pred_region
      %60 = vsyncadd [#allocation9], 0
      %s61 = sshll.u32 %s5, 4
      %s62 = int_to_ptr.hbm [resolvable:$true] %s61
      %s63 = sshll.u32 [#allocation8], 4
      %s64 = int_to_ptr.vmem [resolvable:$true] %s63
      %69 = dma.hbm_to_vmem [thread:$0]  %s62, 1024, %s64, [#allocation9], 64, 64, 4
    $region25: #{tpu_custom_call.1} parent=1 // pred_fallthru
      _
    // Predicated region
    $region26: #{tpu_custom_call.1} parent=1 // pred_check
      _
    $region27: #{tpu_custom_call.1} parent=1 // pred_check_branch
      %71 = sbr.rel (0) target = $region29
    $region28: #{tpu_custom_call.1} parent=1 // pred_region
      _
    $region29: #{tpu_custom_call.1} parent=1 // pred_fallthru
      _
    // Predicated region
    $region30: #{tpu_custom_call.1} parent=1 // pred_check
      _
    $region31: #{tpu_custom_call.1} parent=1 // pred_check_branch
      %73 = sbr.rel (0) target = $region33
    $region32: #{tpu_custom_call.1} parent=1 // pred_region
      %75 = dma.done [#allocation3], 32
    $region33: #{tpu_custom_call.1} parent=1 // pred_fallthru
      _
    // Predicated region
    $region34: #{tpu_custom_call.1} parent=1 // pred_check
      _
    $region35: #{tpu_custom_call.1} parent=1 // pred_check_branch
      %77 = sbr.rel (0) target = $region37
    $region36: #{tpu_custom_call.1} parent=1 // pred_region
      %79 = dma.done [#allocation6], 512
    $region37: #{tpu_custom_call.1} parent=1 // pred_fallthru
      _
    // Predicated region
    $region38: #{tpu_custom_call.1} parent=1 // pred_check
      _
    $region39: #{tpu_custom_call.1} parent=1 // pred_check_branch
      %81 = sbr.rel (0) target = $region41
    $region40: #{tpu_custom_call.1} parent=1 // pred_region
      %83 = dma.done [#allocation6], 1024
    $region41: #{tpu_custom_call.1} parent=1 // pred_fallthru
      _
    // Predicated region
    $region42: #{tpu_custom_call.1} parent=1 // pred_check
      _
    $region43: #{tpu_custom_call.1} parent=1 // pred_check_branch
      %85 = sbr.rel (0) target = $region45
    $region44: #{tpu_custom_call.1} parent=1 // pred_region
      %87 = dma.done [#allocation9], 1024
    $region45: #{tpu_custom_call.1} parent=1 // pred_fallthru
      _
    %v88 = vld [vmem:[#allocation2] sm:$0x3]
    %v89 = vld [vmem:[#allocation5] sm:$0xff]
    %v90 = vld [vmem:[#allocation5 + $0x8] sm:$0xff]
    %v91 = vld [vmem:[#allocation5 + $0x10] sm:$0xff]
    %v92 = vld [vmem:[#allocation5 + $0x18] sm:$0xff]
    %v93 = vld [vmem:[%s2] sm:$0x1]
    %v95 = vperm.slane %v93, 0
    %vm97 = vcmask 261120
    %v99 = vsel %vm97, %v88, 0
    %101 = vmatpush.msra.mxu0 0.0
    %102 = vmatpush.msra.mxu0 0.0
    %103 = vmatpush.msra.mxu0 0.0
    %104 = vmatpush.msra.mxu0 0.0
    %105 = vmatpush.msra.mxu0 0.0
    %106 = vmatpush.msra.mxu0 0.0
    %107 = vmatpush.msra.mxu0 0.0
    %108 = vmatpush.msra.mxu0 0.0
    %109 = vmatpush.msra.mxu0 0.0
    %110 = vmatpush.msra.mxu0 0.0
    %111 = vmatpush.msra.mxu0 0.0
    %112 = vmatpush.msra.mxu0 0.0
    %113 = vmatpush.msra.mxu0 %v92
    %114 = vmatpush.msra.mxu0 %v91
    %115 = vmatpush.msra.mxu0 %v90
    %116 = vmatpush.msra.mxu0 %v89
    %117 = vmatmul.f32.gmra.mxu0 %v99
    %v118 = vpop.f32.mrf.mxu0
    %v119 = vadd.f32 %v95, %v118
    %120 = vdwg.mxu0
    %v121 = vmax.f32 %v119, 0.0
    %v122 = vpack.c.bf16 %v121, %v121
    %v123 = vld [vmem:[#allocation7] sm:$0xf]
    %v124 = vld [vmem:[#allocation7 + $0x4] sm:$0xf]
    %v125 = vld [vmem:[#allocation7 + $0x8] sm:$0xf]
    %v126 = vld [vmem:[#allocation7 + $0xc] sm:$0xf]
    %v127 = vld [vmem:[#allocation7 + $0x10] sm:$0xf]
    %v128 = vld [vmem:[#allocation7 + $0x14] sm:$0xf]
    %v129 = vld [vmem:[#allocation7 + $0x18] sm:$0xf]
    %v130 = vld [vmem:[#allocation7 + $0x1c] sm:$0xf]
    %v131 = vld [vmem:[#allocation7 + $0x20] sm:$0xf]
    %v132 = vld [vmem:[#allocation7 + $0x24] sm:$0xf]
    %v133 = vld [vmem:[#allocation7 + $0x28] sm:$0xf]
    %v134 = vld [vmem:[#allocation7 + $0x2c] sm:$0xf]
    %v135 = vld [vmem:[#allocation7 + $0x30] sm:$0xf]
    %v136 = vld [vmem:[#allocation7 + $0x34] sm:$0xf]
    %v137 = vld [vmem:[#allocation7 + $0x38] sm:$0xf]
    %v138 = vld [vmem:[#allocation7 + $0x3c] sm:$0xf]
    %v139 = vld [vmem:[%s4] sm:$0x1]
    %v141 = vperm.slane %v139, 0
    %v159 = vunpack.c.l.b16 %v123
    %v160 = vunpack.c.l.b16 %v124
    %v161 = vunpack.c.l.b16 %v125
    %v162 = vunpack.c.l.b16 %v126
    %v163 = vunpack.c.l.b16 %v127
    %v164 = vunpack.c.l.b16 %v128
    %v165 = vunpack.c.l.b16 %v129
    %v166 = vunpack.c.l.b16 %v130
    %v167 = vunpack.c.l.b16 %v131
    %v168 = vunpack.c.l.b16 %v132
    %v169 = vunpack.c.l.b16 %v133
    %v170 = vunpack.c.l.b16 %v134
    %v171 = vunpack.c.l.b16 %v135
    %v172 = vunpack.c.l.b16 %v136
    %v173 = vunpack.c.l.b16 %v137
    %v174 = vunpack.c.l.b16 %v138
    %v175 = vpack.c.b16 %v160, %v159
    %v176 = vpack.c.b16 %v162, %v161
    %v177 = vpack.c.b16 %v164, %v163
    %v178 = vpack.c.b16 %v166, %v165
    %v179 = vpack.c.b16 %v168, %v167
    %v180 = vpack.c.b16 %v170, %v169
    %v181 = vpack.c.b16 %v172, %v171
    %v182 = vpack.c.b16 %v174, %v173
    %191 = vmatpush.bf16.msra.mxu0 %v182
    %192 = vmatpush.bf16.msra.mxu0 %v181
    %193 = vmatpush.bf16.msra.mxu0 %v180
    %194 = vmatpush.bf16.msra.mxu0 %v179
    %195 = vmatpush.bf16.msra.mxu0 %v178
    %196 = vmatpush.bf16.msra.mxu0 %v177
    %197 = vmatpush.bf16.msra.mxu0 %v176
    %198 = vmatpush.bf16.msra.mxu0 %v175
    %199 = vmatmul.bf16.gmra.mxu0 %v122
    %v200 = vpop.f32.mrf.mxu0
    %v201 = vadd.f32 %v141, %v200
    %v202 = vpop.f32.mrf.mxu0
    %203 = vdwg.mxu0
    %v204 = vmax.f32 %v201, 0.0
    %v205 = vpack.c.bf16 %v204, %v204
    %v206 = vld [vmem:[#allocation8] sm:$0xf]
    %v207 = vld [vmem:[#allocation8 + $0x4] sm:$0xf]
    %v208 = vld [vmem:[#allocation8 + $0x8] sm:$0xf]
    %v209 = vld [vmem:[#allocation8 + $0xc] sm:$0xf]
    %v210 = vld [vmem:[#allocation8 + $0x10] sm:$0xf]
    %v211 = vld [vmem:[#allocation8 + $0x14] sm:$0xf]
    %v212 = vld [vmem:[#allocation8 + $0x18] sm:$0xf]
    %v213 = vld [vmem:[#allocation8 + $0x1c] sm:$0xf]
    %v214 = vld [vmem:[#allocation8 + $0x20] sm:$0xf]
    %v215 = vld [vmem:[#allocation8 + $0x24] sm:$0xf]
    %v216 = vld [vmem:[#allocation8 + $0x28] sm:$0xf]
    %v217 = vld [vmem:[#allocation8 + $0x2c] sm:$0xf]
    %v218 = vld [vmem:[#allocation8 + $0x30] sm:$0xf]
    %v219 = vld [vmem:[#allocation8 + $0x34] sm:$0xf]
    %v220 = vld [vmem:[#allocation8 + $0x38] sm:$0xf]
    %v221 = vld [vmem:[#allocation8 + $0x3c] sm:$0xf]
    %v222 = vld [vmem:[%s6] sm:$0x1]
    %v224 = vperm.slane %v222, 0
    %v242 = vunpack.c.l.b16 %v206
    %v243 = vunpack.c.l.b16 %v207
    %v244 = vunpack.c.l.b16 %v208
    %v245 = vunpack.c.l.b16 %v209
    %v246 = vunpack.c.l.b16 %v210
    %v247 = vunpack.c.l.b16 %v211
    %v248 = vunpack.c.l.b16 %v212
    %v249 = vunpack.c.l.b16 %v213
    %v250 = vunpack.c.l.b16 %v214
    %v251 = vunpack.c.l.b16 %v215
    %v252 = vunpack.c.l.b16 %v216
    %v253 = vunpack.c.l.b16 %v217
    %v254 = vunpack.c.l.b16 %v218
    %v255 = vunpack.c.l.b16 %v219
    %v256 = vunpack.c.l.b16 %v220
    %v257 = vunpack.c.l.b16 %v221
    %v258 = vpack.c.b16 %v243, %v242
    %v259 = vpack.c.b16 %v245, %v244
    %v260 = vpack.c.b16 %v247, %v246
    %v261 = vpack.c.b16 %v249, %v248
    %v262 = vpack.c.b16 %v251, %v250
    %v263 = vpack.c.b16 %v253, %v252
    %v264 = vpack.c.b16 %v255, %v254
    %v265 = vpack.c.b16 %v257, %v256
    %274 = vmatpush.bf16.msra.mxu0 %v265
    %275 = vmatpush.bf16.msra.mxu0 %v264
    %276 = vmatpush.bf16.msra.mxu0 %v263
    %277 = vmatpush.bf16.msra.mxu0 %v262
    %278 = vmatpush.bf16.msra.mxu0 %v261
    %279 = vmatpush.bf16.msra.mxu0 %v260
    %280 = vmatpush.bf16.msra.mxu0 %v259
    %281 = vmatpush.bf16.msra.mxu0 %v258
    %282 = vmatmul.bf16.gmra.mxu0 %v205
    %v283 = vpop.f32.mrf.mxu0
    %v284 = vadd.f32 %v224, %v283
    %v285 = vpop.f32.mrf.mxu0
    %286 = vdwg.mxu0
    %vm287 = vcmask 58368
    %288 = vst.msk [vmem:[#allocation10] sm:$0x3] %vm287, %v284
    // Predicated region
    $region46: #{tpu_custom_call.1} parent=1 // pred_check
      _
    $region47: #{tpu_custom_call.1} parent=1 // pred_check_branch
      %290 = sbr.rel (0) target = $region49
    $region48: #{tpu_custom_call.1} parent=1 // pred_region
      %292 = vsyncadd [#allocation4], 0
      %s294 = sshll.u32 [#allocation10], 4
      %s295 = int_to_ptr.vmem [resolvable:$true] %s294
      %s296 = sshll.u32 %s7, 4
      %s297 = int_to_ptr.hbm [resolvable:$true] %s296
      %299 = dma.vmem_to_hbm [thread:$0]  %s295, 32, %s297, [#allocation4]
    $region49: #{tpu_custom_call.1} parent=1 // pred_fallthru
      _
    // Predicated region
    $region50: #{tpu_custom_call.1} parent=1 // pred_check
      _
    $region51: #{tpu_custom_call.1} parent=1 // pred_check_branch
      %301 = sbr.rel (0) target = $region53
    $region52: #{tpu_custom_call.1} parent=1 // pred_region
      %303 = dma.done [#allocation4], 32
    $region53: #{tpu_custom_call.1} parent=1 // pred_fallthru
      _
    %304 = vsyncpa [#allocation3], 1
    %305 = vsyncpa [#allocation6], 1
    %306 = vsyncpa [#allocation9], 1
    %307 = vsyncpa [#allocation4], 1

</llo_original>
